<compile_context>
chip_gen: v6e
topology: v6e:2x2x1
jax: 0.10.0
libtpu: 0.0.40
codegen_flags: <defaults>
</compile_context>

<pallas_src>
import math

import jax
import jax.numpy as jnp
from jax import lax
from jax.experimental import pallas as pl
from jax.experimental.pallas import tpu as pltpu


_MAX_ROW_BLOCK = 256     # batch rows per grid step (multiple of 8)
_MAX_LANE_BLOCK = 2048   # flat output lanes (c_blk * T) per grid step


def _round_up(a, m):
    return -(-a // m) * m


def _vmem_usable_bytes():
    """~75% of this generation's per-core VMEM (v7x: 64 MiB, v5e/v6e: 128 MiB)."""
    try:
        cap = int(pltpu.get_tpu_info().vmem_capacity_bytes)
    except Exception:
        cap = 64 * 1024 * 1024          # conservative (v7x-safe) fallback
    return (cap * 3) // 4


def _unlabeled_blocking(B, nclasses, T, nhid, vmem_usable):
    """Generation-aware tile selection for the unlabeled (full distribution) path.

    Guarantees: b_blk % 8 == 0 (or == B_pad); c_blk % 128 == 0 or
    c_blk == ncl_pad (legal + lane-dense blocks); ncl_pad % c_blk == 0; and the
    double-buffered bf16 weight tile plus f32 output/intermediates fit the
    per-generation VMEM budget.
    """
    b_blk = min(_MAX_ROW_BLOCK, _round_up(B, 8))
    B_pad = _round_up(B, b_blk)

    # Per-step lane budget: one bf16 weight tile <= ~1/6 of usable VMEM
    # (double buffered -> 1/3), and f32 output (2 bufs) + ~3 intermediates
    # <= ~1/2 of usable VMEM.
    w_cap = vmem_usable // 6 // max(1, nhid * 2)
    io_cap = vmem_usable // 2 // max(1, _MAX_ROW_BLOCK * 4 * 5)
    lane_cap = min(_MAX_LANE_BLOCK, w_cap, io_cap)
    lane_cap = max(128, (lane_cap // 128) * 128)

    unit = 128 // math.gcd(T, 128)               # classes per 128 flat lanes
    ncl_full = _round_up(nclasses, unit)
    if ncl_full * T <= lane_cap:
        ncl_pad, c_blk = ncl_full, ncl_full      # everything in one class block
    else:
        # c_blk multiple of 128 keeps BOTH the flat (c_blk*T) block and the
        # (b_blk, c_blk) top-probability block lane-aligned.
        c_blk = max(128, (lane_cap // T // 128) * 128)
        ncl_pad = _round_up(nclasses, c_blk)
        # TODO(synk): extremely large T together with large nhid would need a
        # second-level tiling of the per-class token axis.
    return B_pad, b_blk, ncl_pad, c_blk


def prepare_hsm_weights(bottom_W, bottom_b):
    """One-time layout plumbing (cache across forward calls).

    Returns the flat, class-padded, bf16 bottom weights for the unlabeled path
    and a bf16 copy in (nclasses, nhid, T) layout for the labeled-path DMA
    gather, so no per-call relayout/cast of the full vocab weights is needed.
    """
    nclasses, nhid, T = bottom_W.shape
    vmem_usable = _vmem_usable_bytes()
    _, _, ncl_pad, _ = _unlabeled_blocking(_MAX_ROW_BLOCK, nclasses, T, nhid,
                                           vmem_usable)
    ct = nclasses * T
    ct_pad = ncl_pad * T
    w_flat = jnp.transpose(bottom_W, (1, 0, 2)).reshape(nhid, ct)
    w_flat = jnp.pad(w_flat, ((0, 0), (0, ct_pad - ct))).astype(jnp.bfloat16)
    b_flat = jnp.pad(bottom_b.reshape(1, ct).astype(jnp.float32),
                     ((0, 0), (0, ct_pad - ct)))
    return dict(
        w_flat=w_flat,                              # (nhid, ncl_pad*T) bf16
        b_flat=b_flat,                              # (1, ncl_pad*T)    f32
        w_slab=bottom_W.astype(jnp.bfloat16),       # (nclasses, nhid, T) bf16
        b_slab=bottom_b.astype(jnp.float32),        # (nclasses, T)       f32
    )


# ---------------------------------------------------------------------------
# Unlabeled path: full word-probability distribution, (B, nclasses*T).
# ---------------------------------------------------------------------------

def _hsm_word_probs_kernel(x_ref, top_ref, bw_ref, bb_ref, g_ref, gt_ref,
                           out_ref):
    # Bottom logits for the whole class block in one lane-dense bf16 matmul.
    bl = jnp.dot(x_ref[...], bw_ref[...],
                 preferred_element_type=jnp.float32) + bb_ref[...]
    # Row-wide max keeps exp <= 1 (no overflow); the shift cancels inside each
    # per-class normalization.  gsum is clamped below so a fully underflowed
    # class group yields 0 instead of Inf/NaN.
    # TODO(synk): segmented per-class max for trained weights with extreme
    # within-row logit spread.
    e = jnp.exp(bl - jnp.max(bl, axis=-1, keepdims=True))     # (b_blk, ct_blk)
    # Per-class softmax sums via an MXU matmul with the block indicator.
    gsum = jnp.dot(e.astype(jnp.bfloat16), g_ref[...],
                   preferred_element_type=jnp.float32)        # (b_blk, c_blk)
    gsum = jnp.maximum(gsum, 1e-30)
    inv = pl.reciprocal(gsum, approx=True)
    inv = inv * (2.0 - gsum * inv)                            # Newton step
    scale = top_ref[...] * inv                                # (b_blk, c_blk)
    bcast = jnp.dot(scale.astype(jnp.bfloat16), gt_ref[...],
                    preferred_element_type=jnp.float32)       # (b_blk, ct_blk)
    out_ref[...] = (e * bcast).astype(out_ref.dtype)


def _word_probs_call(x, top_probs, prepared, nclasses, T):
    B, nhid = x.shape
    vmem_usable = _vmem_usable_bytes()
    B_pad, b_blk, ncl_pad, c_blk = _unlabeled_blocking(
        B, nclasses, T, nhid, vmem_usable)
    ct_blk = c_blk * T
    ct_pad = ncl_pad * T

    w_flat, b_flat = prepared["w_flat"], prepared["b_flat"]
    assert w_flat.shape == (nhid, ct_pad) and b_flat.shape == (1, ct_pad), (
        "prepared weights do not match this blocking; rebuild with "
        "prepare_hsm_weights()")

    x_pad = jnp.pad(x, ((0, B_pad - B), (0, 0))).astype(jnp.bfloat16)
    # Zero top-probability for padded rows/classes -> padded outputs are 0.
    top_pad = jnp.pad(top_probs.astype(jnp.float32),
                      ((0, B_pad - B), (0, ncl_pad - nclasses)))

    # Class-membership indicator for one class block (0/1 exact in bf16).
    col_cls = jnp.arange(ct_blk, dtype=jnp.int32) // T
    G = (col_cls[:, None] == jnp.arange(c_blk, dtype=jnp.int32)[None, :]
         ).astype(jnp.bfloat16)
    GT = G.T

    # Class block OUTER, batch block INNER -> the (nhid, ct_blk) weight tile
    # stays VMEM-resident across the whole batch axis.
    grid = (ncl_pad // c_blk, B_pad // b_blk)

    out = pl.pallas_call(
        _hsm_word_probs_kernel,
        out_shape=jax.ShapeDtypeStruct((B_pad, ct_pad), jnp.float32),
        grid_spec=pltpu.PrefetchScalarGridSpec(
            num_scalar_prefetch=0,
            grid=grid,
            in_specs=[
                pl.BlockSpec((b_blk, nhid), lambda ci, bi: (bi, 0)),    # x
                pl.BlockSpec((b_blk, c_blk), lambda ci, bi: (bi, ci)),  # top probs
                pl.BlockSpec((nhid, ct_blk), lambda ci, bi: (0, ci)),   # bottom W (resident over bi)
                pl.BlockSpec((1, ct_blk), lambda ci, bi: (0, ci)),      # bottom b
                pl.BlockSpec((ct_blk, c_blk), lambda ci, bi: (0, 0)),   # indicator G
                pl.BlockSpec((c_blk, ct_blk), lambda ci, bi: (0, 0)),   # G^T
            ],
            out_specs=pl.BlockSpec((b_blk, ct_blk), lambda ci, bi: (bi, ci)),
        ),
        compiler_params=pltpu.CompilerParams(
            dimension_semantics=("parallel", "parallel"),
            vmem_limit_bytes=int(vmem_usable)),
    )(x_pad, top_pad, w_flat, b_flat, G, GT)

    return out[:B, :nclasses * T]


# ---------------------------------------------------------------------------
# Labeled path: per-example target probability, no full distribution built.
# ---------------------------------------------------------------------------

def _hsm_target_kernel(top_pos_ref, bot_pos_ref,        # scalar prefetch (SMEM)
                       x_ref, bb_ref, bw_hbm,           # inputs
                       out_ref,                         # (1, b_blk) output
                       wbuf, sem):                      # scratch
    b_blk, _ = x_ref.shape
    T = bb_ref.shape[1]
    base = pl.program_id(0) * b_blk

    def start_fetch(r, slot):
        c = top_pos_ref[base + r]
        pltpu.make_async_copy(bw_hbm.at[c], wbuf.at[slot], sem.at[slot]).start()

    out_ref[...] = jnp.zeros_like(out_ref)
    start_fetch(0, 0)

    lane = lax.broadcasted_iota(jnp.int32, (1, b_blk), 1)
    tok = lax.broadcasted_iota(jnp.int32, (1, T), 1)

    @pl.loop(0, b_blk)
    def _(r):
        slot = r % 2
        pltpu.make_async_copy(bw_hbm.at[0], wbuf.at[slot], sem.at[slot]).wait()

        @pl.when(r + 1 < b_blk)
        def _():
            start_fetch(r + 1, (r + 1) % 2)

        c = top_pos_ref[base + r]
        xr = x_ref[pl.ds(r, 1), :]                               # (1, nhid) bf16
        logits = jnp.dot(xr, wbuf[slot],
                         preferred_element_type=jnp.float32)     # (1, T)
        logits = logits + bb_ref[pl.ds(c, 1), :]
        e = jnp.exp(logits - jnp.max(logits, axis=-1, keepdims=True))
        s = jnp.sum(e, axis=-1, keepdims=True)
        inv = pl.reciprocal(s, approx=True)
        inv = inv * (2.0 - s * inv)                              # Newton step
        t = bot_pos_ref[base + r]
        p = jnp.sum(jnp.where(tok == t, e, 0.0), axis=-1, keepdims=True) * inv
        out_ref[...] = jnp.where(lane == r, p, out_ref[...])


def _target_probs_call(x, top_probs, prepared, labels, nclasses, T):
    B, nhid = x.shape
    labels = labels.astype(jnp.int32)
    top_pos = labels // T
    bot_pos = labels % T

    b_blk = min(_MAX_ROW_BLOCK, _round_up(B, 8))
    B_pad = _round_up(B, b_blk)

    x_pad = jnp.pad(x, ((0, B_pad - B), (0, 0))).astype(jnp.bfloat16)
    top_pos_pad = jnp.pad(top_pos, (0, B_pad - B))   # pad with class 0 (valid)
    bot_pos_pad = jnp.pad(bot_pos, (0, B_pad - B))

    w_slab, b_slab = prepared["w_slab"], prepared["b_slab"]

    bottom_pick = pl.pallas_call(
        _hsm_target_kernel,
        out_shape=jax.ShapeDtypeStruct((1, B_pad), jnp.float32),
        grid_spec=pltpu.PrefetchScalarGridSpec(
            num_scalar_prefetch=2,
            grid=(B_pad // b_blk,),
            in_specs=[
                pl.BlockSpec((b_blk, nhid), lambda bi, pt, pb: (bi, 0)),   # x
                pl.BlockSpec((nclasses, T), lambda bi, pt, pb: (0, 0)),    # bottom_b
                pl.BlockSpec(memory_space=pl.ANY),                         # bottom_W (HBM)
            ],
            out_specs=pl.BlockSpec((1, b_blk), lambda bi, pt, pb: (0, bi)),
            scratch_shapes=[
                pltpu.VMEM((2, nhid, T), jnp.bfloat16),
                pltpu.SemaphoreType.DMA((2,)),
            ],
        ),
        compiler_params=pltpu.CompilerParams(
            dimension_semantics=("parallel",),
            vmem_limit_bytes=int(_vmem_usable_bytes())),
    )(top_pos_pad, bot_pos_pad, x_pad, b_slab, w_slab)

    bottom_pick = bottom_pick[0, :B]
    top_pick = jnp.take_along_axis(top_probs, top_pos[:, None], axis=1)[:, 0]
    return top_pick * bottom_pick


# ---------------------------------------------------------------------------
# Public forward
# ---------------------------------------------------------------------------

def hierarchical_softmax_forward(x, top_W, top_b, bottom_W, bottom_b,
                                 labels=None, prepared=None):
    """Pallas implementation of HierarchicalSoftmax.forward."""
    if prepared is None:
        prepared = prepare_hsm_weights(bottom_W, bottom_b)
    nclasses, nhid, T = bottom_W.shape
    assert x.shape[1] == nhid

    # Top-level softmax, hoisted out of the Pallas grids (computed once, f32).
    top_logits = jnp.dot(x.astype(jnp.float32), top_W.astype(jnp.float32),
                         preferred_element_type=jnp.float32)
    top_probs = jax.nn.softmax(top_logits + top_b.reshape(1, nclasses), axis=-1)

    if labels is None:
        return _word_probs_call(x, top_probs, prepared, nclasses, T)
    return _target_probs_call(x, top_probs, prepared, labels, nclasses, T)


def _reference_forward(x, top_W, top_b, bottom_W, bottom_b, labels=None):
    """Pure-JAX reference mirroring the PyTorch module semantics."""
    top_probs = jax.nn.softmax(x @ top_W + top_b, axis=1)
    bottom_logits = jnp.einsum('bd,cdt->bct', x, bottom_W) + bottom_b[None]
    bottom_probs = jax.nn.softmax(bottom_logits, axis=-1)
    word = (top_probs[:, :, None] * bottom_probs).reshape(x.shape[0], -1)
    if labels is None:
        return word
    T = bottom_W.shape[-1]
    tp, bp = labels // T, labels % T
    b = jnp.arange(x.shape[0])
    return top_probs[b, tp] * bottom_probs[b, tp, bp]


if __name__ == "__main__":
    # Small shapes consistent with the module: ntokens=64 -> T=8, nclasses=8.
    ntokens = 64
    nhid = 32
    B = 8
    T = 8               # ntokens_per_class = ceil(sqrt(64))
    nclasses = 8        # ceil(64 / 8)

    key = jax.random.PRNGKey(0)
    k_x, k_tw, k_bw, k_lab = jax.random.split(key, 4)

    x = jax.random.normal(k_x, (B, nhid), dtype=jnp.float32)
    initrange = 0.1
    top_W = jax.random.uniform(k_tw, (nhid, nclasses), jnp.float32,
                               -initrange, initrange)
    top_b = jnp.zeros((nclasses,), jnp.float32)
    bottom_W = jax.random.uniform(k_bw, (nclasses, nhid, T), jnp.float32,
                                  -initrange, initrange)
    bottom_b = jnp.zeros((nclasses, T), jnp.float32)
    labels = jax.random.randint(k_lab, (B,), 0, ntokens)

    # One-time weight layout plumbing (cache across forward calls).
    prepared = prepare_hsm_weights(bottom_W, bottom_b)

    fwd = jax.jit(hierarchical_softmax_forward)

    # Unlabeled path: full word-probability distribution, (B, nclasses*T).
    word_probs = jax.block_until_ready(
        fwd(x, top_W, top_b, bottom_W, bottom_b, prepared=prepared))
    ref_word = _reference_forward(x, top_W, top_b, bottom_W, bottom_b)
    assert word_probs.shape == (B, nclasses * T)
    # bf16 MXU operands -> tolerance loosened vs the f32 reference.
    assert jnp.allclose(word_probs, ref_word, rtol=3e-2, atol=1e-6), (
        float(jnp.max(jnp.abs(word_probs - ref_word))))

    # Labeled path: per-example target probability, no full distribution.
    target_probs = jax.block_until_ready(
        fwd(x, top_W, top_b, bottom_W, bottom_b, labels, prepared=prepared))
    ref_target = _reference_forward(x, top_W, top_b, bottom_W, bottom_b, labels)
    assert target_probs.shape == (B,)
    assert jnp.allclose(target_probs, ref_target, rtol=3e-2, atol=1e-6), (
        float(jnp.max(jnp.abs(target_probs - ref_target))))

    print("KERNEL_OK")
</pallas_src>

<mosaic_0001>
module attributes {stable_mosaic.version = 11 : i64} {
  func.func @_hsm_word_probs_kernel(%arg0: i32, %arg1: i32, %arg2: memref<8x32xbf16, #tpu.memory_space<vmem>>, %arg3: memref<8x16xf32, #tpu.memory_space<vmem>>, %arg4: memref<32x128xbf16, #tpu.memory_space<vmem>>, %arg5: memref<1x128xf32, #tpu.memory_space<vmem>>, %arg6: memref<128x16xbf16, #tpu.memory_space<vmem>>, %arg7: memref<16x128xbf16, #tpu.memory_space<vmem>>, %arg8: memref<8x128xf32, #tpu.memory_space<vmem>>) attributes {dimension_semantics = [#tpu.dimension_semantics<parallel>, #tpu.dimension_semantics<parallel>], iteration_bounds = array<i64: 1, 1>, scalar_prefetch = 0 : i64, scratch_operands = 0 : i64, tpu.core_type = #tpu.core_type<tc>, window_params = [{transform_indices = @transform_0, window_bounds = array<i64: 8, 32>}, {transform_indices = @transform_1, window_bounds = array<i64: 8, 16>}, {transform_indices = @transform_2, window_bounds = array<i64: 32, 128>}, {transform_indices = @transform_3, window_bounds = array<i64: 1, 128>}, {pipeline_mode = #tpu.pipeline_mode<synchronous>, transform_indices = @transform_4, window_bounds = array<i64: 128, 16>}, {pipeline_mode = #tpu.pipeline_mode<synchronous>, transform_indices = @transform_5, window_bounds = array<i64: 16, 128>}, {transform_indices = @transform_6, window_bounds = array<i64: 8, 128>}]} {
    %c0 = arith.constant 0 : index
    %c0_0 = arith.constant 0 : index
    %0 = vector.load %arg2[%c0, %c0_0] : memref<8x32xbf16, #tpu.memory_space<vmem>>, vector<8x32xbf16>
    %c0_1 = arith.constant 0 : index
    %c0_2 = arith.constant 0 : index
    %1 = vector.load %arg4[%c0_1, %c0_2] : memref<32x128xbf16, #tpu.memory_space<vmem>>, vector<32x128xbf16>
    %cst = arith.constant dense<0.000000e+00> : vector<8x128xf32>
    %2 = tpu.matmul %0, %1, %cst {dimension_numbers = #tpu.dot_dimension_numbers<[1], [0], [0], [1], [0, 0, 1, 1], [], []>} : vector<8x32xbf16>, vector<32x128xbf16>, vector<8x128xf32> -> vector<8x128xf32>
    %c0_3 = arith.constant 0 : index
    %c0_4 = arith.constant 0 : index
    %3 = vector.load %arg5[%c0_3, %c0_4] : memref<1x128xf32, #tpu.memory_space<vmem>>, vector<1x128xf32>
    %4 = vector.broadcast %3 : vector<1x128xf32> to vector<8x128xf32>
    %5 = arith.addf %2, %4 : vector<8x128xf32>
    %cst_5 = arith.constant dense<0xFF800000> : vector<8xf32>
    %6 = vector.multi_reduction <maximumf>, %5, %cst_5 [1] : vector<8x128xf32> to vector<8xf32>
    %7 = vector.shape_cast %6 : vector<8xf32> to vector<8x1xf32>
    %8 = vector.broadcast %7 : vector<8x1xf32> to vector<8x128xf32>
    %9 = arith.subf %5, %8 : vector<8x128xf32>
    %10 = math.exp %9 : vector<8x128xf32>
    %11 = arith.truncf %10 : vector<8x128xf32> to vector<8x128xbf16>
    %c0_6 = arith.constant 0 : index
    %c0_7 = arith.constant 0 : index
    %12 = vector.load %arg6[%c0_6, %c0_7] : memref<128x16xbf16, #tpu.memory_space<vmem>>, vector<128x16xbf16>
    %cst_8 = arith.constant dense<0.000000e+00> : vector<8x16xf32>
    %13 = tpu.matmul %11, %12, %cst_8 {dimension_numbers = #tpu.dot_dimension_numbers<[1], [0], [0], [1], [0, 0, 1, 1], [], []>} : vector<8x128xbf16>, vector<128x16xbf16>, vector<8x16xf32> -> vector<8x16xf32>
    %cst_9 = arith.constant 1.000000e-30 : f32
    %14 = vector.broadcast %cst_9 : f32 to vector<8x16xf32>
    %15 = arith.maximumf %13, %14 : vector<8x16xf32>
    %16 = tpu.reciprocal %15 {approx = true} : vector<8x16xf32> -> vector<8x16xf32>
    %17 = arith.mulf %15, %16 : vector<8x16xf32>
    %cst_10 = arith.constant 2.000000e+00 : f32
    %18 = vector.broadcast %cst_10 : f32 to vector<8x16xf32>
    %19 = arith.subf %18, %17 : vector<8x16xf32>
    %20 = arith.mulf %16, %19 : vector<8x16xf32>
    %c0_11 = arith.constant 0 : index
    %c0_12 = arith.constant 0 : index
    %21 = vector.load %arg3[%c0_11, %c0_12] : memref<8x16xf32, #tpu.memory_space<vmem>>, vector<8x16xf32>
    %22 = arith.mulf %21, %20 : vector<8x16xf32>
    %23 = arith.truncf %22 : vector<8x16xf32> to vector<8x16xbf16>
    %c0_13 = arith.constant 0 : index
    %c0_14 = arith.constant 0 : index
    %24 = vector.load %arg7[%c0_13, %c0_14] : memref<16x128xbf16, #tpu.memory_space<vmem>>, vector<16x128xbf16>
    %cst_15 = arith.constant dense<0.000000e+00> : vector<8x128xf32>
    %25 = tpu.matmul %23, %24, %cst_15 {dimension_numbers = #tpu.dot_dimension_numbers<[1], [0], [0], [1], [0, 0, 1, 1], [], []>} : vector<8x16xbf16>, vector<16x128xbf16>, vector<8x128xf32> -> vector<8x128xf32>
    %26 = arith.mulf %10, %25 : vector<8x128xf32>
    %c0_16 = arith.constant 0 : index
    %c0_17 = arith.constant 0 : index
    %27 = vector.load %arg8[%c0_16, %c0_17] : memref<8x128xf32, #tpu.memory_space<vmem>>, vector<8x128xf32>
    tpu.vector_store %arg8[%c0_16, %c0_17], %26 {strides = array<i32>} : memref<8x128xf32, #tpu.memory_space<vmem>>, vector<8x128xf32>,
    return
  }
  func.func @transform_0(%arg0: i32, %arg1: i32) -> (i32, i32) {
    %c0_i32 = arith.constant 0 : i32
    %c0_i32_0 = arith.constant 0 : i32
    return %arg1, %c0_i32 : i32, i32
  }
  func.func @transform_1(%arg0: i32, %arg1: i32) -> (i32, i32) {
    %c0_i32 = arith.constant 0 : i32
    return %arg1, %arg0 : i32, i32
  }
  func.func @transform_2(%arg0: i32, %arg1: i32) -> (i32, i32) {
    %c0_i32 = arith.constant 0 : i32
    %c0_i32_0 = arith.constant 0 : i32
    return %c0_i32, %arg0 : i32, i32
  }
  func.func @transform_3(%arg0: i32, %arg1: i32) -> (i32, i32) {
    %c0_i32 = arith.constant 0 : i32
    %c0_i32_0 = arith.constant 0 : i32
    return %c0_i32, %arg0 : i32, i32
  }
  func.func @transform_4(%arg0: i32, %arg1: i32) -> (i32, i32) {
    %c0_i32 = arith.constant 0 : i32
    %c0_i32_0 = arith.constant 0 : i32
    %c0_i32_1 = arith.constant 0 : i32
    return %c0_i32, %c0_i32_0 : i32, i32
  }
  func.func @transform_5(%arg0: i32, %arg1: i32) -> (i32, i32) {
    %c0_i32 = arith.constant 0 : i32
    %c0_i32_0 = arith.constant 0 : i32
    %c0_i32_1 = arith.constant 0 : i32
    return %c0_i32, %c0_i32_0 : i32, i32
  }
  func.func @transform_6(%arg0: i32, %arg1: i32) -> (i32, i32) {
    %c0_i32 = arith.constant 0 : i32
    return %arg1, %arg0 : i32, i32
  }
}

</mosaic_0001>

<llo_original>
// kernel: hierarchical_softmax_forward.1
$region0: #{hierarchical_softmax_forward.1}
  #allocation0 [shape = 'u32[]', space=smem, size = 0x4, offset = 0x4, fixed_abs, tag = 'smem constant byte address 0x4 - core index']
  #allocation1 [shape = 'u32[144,128]{1,0:T(1,128)}', space=vmem, size = 0x12000, scoped, tag = 'internal scratch']
  %s0 = inlined_call_operand.vmem [shape: bf16[8,32], index: 0, kind: input, shape index: {}]
  %s1 = inlined_call_operand.vmem [shape: f32[8,16], index: 1, kind: input, shape index: {}]
  %s2 = inlined_call_operand.vmem [shape: bf16[32,128], index: 2, kind: input, shape index: {}]
  %s3 = inlined_call_operand.vmem [shape: f32[1,128], index: 3, kind: input, shape index: {}]
  %s4 = inlined_call_operand.vmem [shape: bf16[128,16], index: 4, kind: input, shape index: {}]
  %s5 = inlined_call_operand.vmem [shape: bf16[16,128], index: 5, kind: input, shape index: {}]
  %s6 = inlined_call_operand.hbm [shape: f32[8,128], index: 6, kind: output, shape index: {}]
  %s7 = sld [smem:[#allocation0]]
  $region34: #{hierarchical_softmax_forward.1} parent=0
    _
  %s9 = ssub.s32 1, %s7
  %s10 = scalar_select 0, %s9, %s7
  $region1: #{hierarchical_softmax_forward.1} parent=0
    #allocation2 [shape = 'u8[4096]{0}', space=vmem, size = 0x1000, scoped, tag = 'output window, operand 0, single buffered']
    #allocation3 [shape = 's32[1]{0}', space=sflag, size = 0x4, scoped, tag = 'scoped memory for hierarchical_softmax_forward.1']
    %11 = vsyncpa [#allocation3], 0
    // Predicated region
    $region2: #{hierarchical_softmax_forward.1} parent=1 // pred_check
      _
    $region3: #{hierarchical_softmax_forward.1} parent=1 // pred_check_branch
      %13 = sbr.rel (0) target = $region5
    $region4: #{hierarchical_softmax_forward.1} parent=1 // pred_region
      _
    $region5: #{hierarchical_softmax_forward.1} parent=1 // pred_fallthru
      _
    // Predicated region
    $region6: #{hierarchical_softmax_forward.1} parent=1 // pred_check
      _
    $region7: #{hierarchical_softmax_forward.1} parent=1 // pred_check_branch
      %15 = sbr.rel (0) target = $region9
    $region8: #{hierarchical_softmax_forward.1} parent=1 // pred_region
      _
    $region9: #{hierarchical_softmax_forward.1} parent=1 // pred_fallthru
      _
    // Predicated region
    $region10: #{hierarchical_softmax_forward.1} parent=1 // pred_check
      _
    $region11: #{hierarchical_softmax_forward.1} parent=1 // pred_check_branch
      %17 = sbr.rel (0) target = $region13
    $region12: #{hierarchical_softmax_forward.1} parent=1 // pred_region
      _
    $region13: #{hierarchical_softmax_forward.1} parent=1 // pred_fallthru
      _
    // Predicated region
    $region14: #{hierarchical_softmax_forward.1} parent=1 // pred_check
      _
    $region15: #{hierarchical_softmax_forward.1} parent=1 // pred_check_branch
      %19 = sbr.rel (0) target = $region17
    $region16: #{hierarchical_softmax_forward.1} parent=1 // pred_region
      _
    $region17: #{hierarchical_softmax_forward.1} parent=1 // pred_fallthru
      _
    // Predicated region
    $region18: #{hierarchical_softmax_forward.1} parent=1 // pred_check
      _
    $region19: #{hierarchical_softmax_forward.1} parent=1 // pred_check_branch
      %21 = sbr.rel (0) target = $region21
    $region20: #{hierarchical_softmax_forward.1} parent=1 // pred_region
      _
    $region21: #{hierarchical_softmax_forward.1} parent=1 // pred_fallthru
      _
    // Predicated region
    $region22: #{hierarchical_softmax_forward.1} parent=1 // pred_check
      _
    $region23: #{hierarchical_softmax_forward.1} parent=1 // pred_check_branch
      %23 = sbr.rel (0) target = $region25
    $region24: #{hierarchical_softmax_forward.1} parent=1 // pred_region
      _
    $region25: #{hierarchical_softmax_forward.1} parent=1 // pred_fallthru
      _
    %v25 = vld [vmem:[%s0] sm:$0xf]
    %v26 = vld [vmem:[%s2] sm:$0xf]
    %v27 = vld [vmem:[%s2 + $0x4] sm:$0xf]
    %v28 = vld [vmem:[%s2 + $0x8] sm:$0xf]
    %v29 = vld [vmem:[%s2 + $0xc] sm:$0xf]
    %v30 = vld [vmem:[%s3] sm:$0x1]
    %v32 = vlaneseq
    %v33 = vshrl.u32 %v32, 7
    %v34 = vsub.s32 0, %v33
    %v35 = vrot.slane %v30, %v34
    %v41 = vunpack.c.l.b16 %v26
    %v42 = vunpack.c.l.b16 %v27
    %v43 = vunpack.c.l.b16 %v28
    %v44 = vunpack.c.l.b16 %v29
    %v45 = vpack.c.b16 %v42, %v41
    %v46 = vpack.c.b16 %v44, %v43
    %vm49 = vcmask 261120
    %v51 = vsel %vm49, %v25, 0
    %53 = vmatprep.subr.bf16.mxu0 0
    %54 = vmatpush1.bf16.msra.mxu0 0
    %55 = vmatprep.subr.bf16.mxu0 0
    %56 = vmatpush1.bf16.msra.mxu0 0
    %57 = vmatprep.subr.bf16.mxu0 0
    %58 = vmatpush1.bf16.msra.mxu0 0
    %59 = vmatprep.subr.bf16.mxu0 0
    %60 = vmatpush1.bf16.msra.mxu0 0
    %61 = vmatprep.subr.bf16.mxu0 0
    %62 = vmatpush1.bf16.msra.mxu0 0
    %63 = vmatprep.subr.bf16.mxu0 0
    %64 = vmatpush1.bf16.msra.mxu0 0
    %65 = vmatprep.subr.bf16.mxu0 0
    %66 = vmatpush1.bf16.msra.mxu0 %v46
    %67 = vmatprep.subr.bf16.mxu0 0
    %68 = vmatpush1.bf16.msra.mxu0 %v45
    %69 = vmatprep.subr.bf16.mxu0 0
    %70 = vmatpush2.bf16.msra.mxu0 0
    %71 = vmatprep.subr.bf16.mxu0 0
    %72 = vmatpush2.bf16.msra.mxu0 0
    %73 = vmatprep.subr.bf16.mxu0 0
    %74 = vmatpush2.bf16.msra.mxu0 0
    %75 = vmatprep.subr.bf16.mxu0 0
    %76 = vmatpush2.bf16.msra.mxu0 0
    %77 = vmatprep.subr.bf16.mxu0 0
    %78 = vmatpush2.bf16.msra.mxu0 0
    %79 = vmatprep.subr.bf16.mxu0 0
    %80 = vmatpush2.bf16.msra.mxu0 0
    %81 = vmatprep.subr.bf16.mxu0 0
    %82 = vmatpush2.bf16.msra.mxu0 0
    %83 = vmatprep.subr.bf16.mxu0 0
    %84 = vmatpush2.bf16.msra.mxu0 0
    %85 = vmatprep.mubr.bf16.mxu0 0
    %86 = vmatmul.mubr.bf16.gmra.mxu0 %v51
    %v87 = vpop.f32.mrf.mxu0
    %v88 = vadd.f32 %v35, %v87
    %v89 = vpop.f32.mrf.mxu0
    %v90 = vpop.f32.mrf.mxu0
    %v91 = vpop.f32.mrf.mxu0
    %92 = vdwg.mxu0
    %93 = vmax.xlane.f32.xlu0 %v88
    %v94 = vpop.xlane.xlu0 %93
    %v95 = vsub.f32 %v88, %v94
    %v96 = vmul.f32 %v95, 1.442695
    %v97 = vpow.pop %v96
    %v98 = vpack.c.bf16 %v97, %v97
    %v99 = vld [vmem:[%s4] sm:$0xf]
    %v100 = vld [vmem:[%s4 + $0x4] sm:$0xf]
    %v101 = vld [vmem:[%s4 + $0x8] sm:$0xf]
    %v102 = vld [vmem:[%s4 + $0xc] sm:$0xf]
    %v103 = vld [vmem:[%s4 + $0x10] sm:$0xf]
    %v104 = vld [vmem:[%s4 + $0x14] sm:$0xf]
    %v105 = vld [vmem:[%s4 + $0x18] sm:$0xf]
    %v106 = vld [vmem:[%s4 + $0x1c] sm:$0xf]
    %v107 = vld [vmem:[%s4 + $0x20] sm:$0xf]
    %v108 = vld [vmem:[%s4 + $0x24] sm:$0xf]
    %v109 = vld [vmem:[%s4 + $0x28] sm:$0xf]
    %v110 = vld [vmem:[%s4 + $0x2c] sm:$0xf]
    %v111 = vld [vmem:[%s4 + $0x30] sm:$0xf]
    %v112 = vld [vmem:[%s4 + $0x34] sm:$0xf]
    %v113 = vld [vmem:[%s4 + $0x38] sm:$0xf]
    %v114 = vld [vmem:[%s4 + $0x3c] sm:$0xf]
    %v131 = vunpack.c.l.b16 %v99
    %v132 = vunpack.c.l.b16 %v100
    %v133 = vunpack.c.l.b16 %v101
    %v134 = vunpack.c.l.b16 %v102
    %v135 = vunpack.c.l.b16 %v103
    %v136 = vunpack.c.l.b16 %v104
    %v137 = vunpack.c.l.b16 %v105
    %v138 = vunpack.c.l.b16 %v106
    %v139 = vunpack.c.l.b16 %v107
    %v140 = vunpack.c.l.b16 %v108
    %v141 = vunpack.c.l.b16 %v109
    %v142 = vunpack.c.l.b16 %v110
    %v143 = vunpack.c.l.b16 %v111
    %v144 = vunpack.c.l.b16 %v112
    %v145 = vunpack.c.l.b16 %v113
    %v146 = vunpack.c.l.b16 %v114
    %v147 = vpack.c.b16 %v132, %v131
    %v148 = vpack.c.b16 %v134, %v133
    %v149 = vpack.c.b16 %v136, %v135
    %v150 = vpack.c.b16 %v138, %v137
    %v151 = vpack.c.b16 %v140, %v139
    %v152 = vpack.c.b16 %v142, %v141
    %v153 = vpack.c.b16 %v144, %v143
    %v154 = vpack.c.b16 %v146, %v145
    %163 = vmatprep.subr.bf16.mxu0 0
    %164 = vmatpush1.bf16.msra.mxu0 %v154
    %165 = vmatprep.subr.bf16.mxu0 0
    %166 = vmatpush1.bf16.msra.mxu0 %v153
    %167 = vmatprep.subr.bf16.mxu0 0
    %168 = vmatpush1.bf16.msra.mxu0 %v152
    %169 = vmatprep.subr.bf16.mxu0 0
    %170 = vmatpush1.bf16.msra.mxu0 %v151
    %171 = vmatprep.subr.bf16.mxu0 0
    %172 = vmatpush1.bf16.msra.mxu0 %v150
    %173 = vmatprep.subr.bf16.mxu0 0
    %174 = vmatpush1.bf16.msra.mxu0 %v149
    %175 = vmatprep.subr.bf16.mxu0 0
    %176 = vmatpush1.bf16.msra.mxu0 %v148
    %177 = vmatprep.subr.bf16.mxu0 0
    %178 = vmatpush1.bf16.msra.mxu0 %v147
    %179 = vmatprep.subr.bf16.mxu0 0
    %180 = vmatpush2.bf16.msra.mxu0 0
    %181 = vmatprep.subr.bf16.mxu0 0
    %182 = vmatpush2.bf16.msra.mxu0 0
    %183 = vmatprep.subr.bf16.mxu0 0
    %184 = vmatpush2.bf16.msra.mxu0 0
    %185 = vmatprep.subr.bf16.mxu0 0
    %186 = vmatpush2.bf16.msra.mxu0 0
    %187 = vmatprep.subr.bf16.mxu0 0
    %188 = vmatpush2.bf16.msra.mxu0 0
    %189 = vmatprep.subr.bf16.mxu0 0
    %190 = vmatpush2.bf16.msra.mxu0 0
    %191 = vmatprep.subr.bf16.mxu0 0
    %192 = vmatpush2.bf16.msra.mxu0 0
    %193 = vmatprep.subr.bf16.mxu0 0
    %194 = vmatpush2.bf16.msra.mxu0 0
    %195 = vmatprep.mubr.bf16.mxu0 0
    %196 = vmatmul.mubr.bf16.gmra.mxu0 %v98
    %v197 = vpop.f32.mrf.mxu0
    %v198 = vadd.f32 0.0, %v197
    %v199 = vpop.f32.mrf.mxu0
    %v200 = vpop.f32.mrf.mxu0
    %v201 = vpop.f32.mrf.mxu0
    %202 = vdwg.mxu0
    %v203 = vmax.f32 %v198, 1e-30
    %v204 = vrcp.pop %v203
    %v205 = vmul.f32 %v203, %v204
    %v206 = vsub.f32 2.0, %v205
    %v207 = vmul.f32 %v204, %v206
    %v208 = vld [vmem:[%s1] sm:$0xff]
    %v209 = vmul.f32 %v208, %v207
    %v210 = vpack.c.bf16 %v209, %v209
    %v211 = vld [vmem:[%s5] sm:$0xf]
    %v212 = vld [vmem:[%s5 + $0x4] sm:$0xf]
    %v215 = vunpack.c.l.b16 %v211
    %v216 = vunpack.c.l.b16 %v212
    %v217 = vpack.c.b16 %v216, %v215
    %vm219 = vcmask 130048
    %v221 = vsel %vm219, %v210, 0
    %223 = vmatprep.subr.bf16.mxu0 0
    %224 = vmatpush1.bf16.msra.mxu0 0
    %225 = vmatprep.subr.bf16.mxu0 0
    %226 = vmatpush1.bf16.msra.mxu0 0
    %227 = vmatprep.subr.bf16.mxu0 0
    %228 = vmatpush1.bf16.msra.mxu0 0
    %229 = vmatprep.subr.bf16.mxu0 0
    %230 = vmatpush1.bf16.msra.mxu0 0
    %231 = vmatprep.subr.bf16.mxu0 0
    %232 = vmatpush1.bf16.msra.mxu0 0
    %233 = vmatprep.subr.bf16.mxu0 0
    %234 = vmatpush1.bf16.msra.mxu0 0
    %235 = vmatprep.subr.bf16.mxu0 0
    %236 = vmatpush1.bf16.msra.mxu0 0
    %237 = vmatprep.subr.bf16.mxu0 0
    %238 = vmatpush1.bf16.msra.mxu0 %v217
    %239 = vmatprep.subr.bf16.mxu0 0
    %240 = vmatpush2.bf16.msra.mxu0 0
    %241 = vmatprep.subr.bf16.mxu0 0
    %242 = vmatpush2.bf16.msra.mxu0 0
    %243 = vmatprep.subr.bf16.mxu0 0
    %244 = vmatpush2.bf16.msra.mxu0 0
    %245 = vmatprep.subr.bf16.mxu0 0
    %246 = vmatpush2.bf16.msra.mxu0 0
    %247 = vmatprep.subr.bf16.mxu0 0
    %248 = vmatpush2.bf16.msra.mxu0 0
    %249 = vmatprep.subr.bf16.mxu0 0
    %250 = vmatpush2.bf16.msra.mxu0 0
    %251 = vmatprep.subr.bf16.mxu0 0
    %252 = vmatpush2.bf16.msra.mxu0 0
    %253 = vmatprep.subr.bf16.mxu0 0
    %254 = vmatpush2.bf16.msra.mxu0 0
    %255 = vmatprep.mubr.bf16.mxu0 0
    %256 = vmatmul.mubr.bf16.gmra.mxu0 %v221
    %v257 = vpop.f32.mrf.mxu0
    %v258 = vadd.f32 0.0, %v257
    %v259 = vpop.f32.mrf.mxu0
    %v260 = vpop.f32.mrf.mxu0
    %v261 = vpop.f32.mrf.mxu0
    %262 = vdwg.mxu0
    %v263 = vmul.f32 %v97, %v258
    %264 = vst [vmem:[#allocation2] sm:$0xff] %v263
    // Predicated region
    $region26: #{hierarchical_softmax_forward.1} parent=1 // pred_check
      _
    $region27: #{hierarchical_softmax_forward.1} parent=1 // pred_check_branch
      %266 = sbr.rel (0) target = $region29
    $region28: #{hierarchical_softmax_forward.1} parent=1 // pred_region
      %s268 = ssub.s32 128, 128
      %269 = vsyncadd [#allocation3], %s268
      %s271 = sshll.u32 [#allocation2], 4
      %s272 = int_to_ptr.vmem [resolvable:$true] %s271
      %274 = dma.vmem_to_hbm [thread:$0]  %s272, 128, %s6, [#allocation3]
    $region29: #{hierarchical_softmax_forward.1} parent=1 // pred_fallthru
      _
    // Predicated region
    $region30: #{hierarchical_softmax_forward.1} parent=1 // pred_check
      _
    $region31: #{hierarchical_softmax_forward.1} parent=1 // pred_check_branch
      %276 = sbr.rel (0) target = $region33
    $region32: #{hierarchical_softmax_forward.1} parent=1 // pred_region
      %277 = dma.done [#allocation3], 128
    $region33: #{hierarchical_softmax_forward.1} parent=1 // pred_fallthru
      _
    %278 = vsyncpa [#allocation3], 1

</llo_original>
